<compile_context>
chip_gen: v7x
topology: tpu7x:2x2x1
jax: 0.10.0
libtpu: 0.0.40
codegen_flags: <defaults>
</compile_context>

<pallas_src>
import math
import functools

import jax
import jax.numpy as jnp
from jax.experimental import pallas as pl
from jax.experimental.pallas import tpu as pltpu


# --------------------------------------------------------------------------- #
# Kernel
# --------------------------------------------------------------------------- #
def _rnn_cell_kernel(xh_ref, w_ref, *rest, nonlinearity: str, has_bias: bool):
    """One (TB, TH) output tile: single fused MXU matmul (+ bias) + activation.

    xh_ref: (TB, K)   fused [x | h] activations (K = I + H, or K = I on the
                      hidden=None fast path)
    w_ref:  (K, TH)   K-major fused weights [W_ih | W_hh].T (MXU-native RHS,
                      no in-kernel transpose)
    bias:   (1, TH)   f32 fused bias (optional)
    """
    if has_bias:
        b_ref, out_ref = rest
    else:
        (out_ref,) = rest

    acc = jnp.dot(xh_ref[...], w_ref[...], preferred_element_type=jnp.float32)
    if has_bias:
        acc = acc + b_ref[...]                     # f32 bias, broadcasts over TB

    if nonlinearity == 'tanh':
        acc = jnp.tanh(acc)                        # EUP
    else:                                          # 'relu'
        acc = jnp.maximum(acc, 0.0)                # VPU
    out_ref[...] = acc.astype(out_ref.dtype)


# --------------------------------------------------------------------------- #
# Tiling / VMEM planning
# --------------------------------------------------------------------------- #
def _vmem_capacity_bytes():
    try:
        return int(pltpu.get_tpu_info().vmem_capacity_bytes)
    except Exception:
        return 64 * 1024 * 1024        # conservative (v7x-class) fallback


def _pick_th(H, max_th):
    """Hidden tile: multiple of 256 (fits 256x256 MXU, also ok on v5e's 128),
    preferring values that divide H evenly (no thin masked last tile)."""
    if H <= max_th:
        return H
    for step in (256, 128):
        t = (max_th // step) * step
        while t >= step:
            if H % t == 0:
                return t
            t -= step
    return max(128, (max_th // 128) * 128)


def _tile_plan(B, K, H, itemsize, has_bias, block_b, block_h):
    """Pick (TB, TH) and a generation-aware vmem limit."""
    cap = _vmem_capacity_bytes()
    if cap <= 80 * 1024 * 1024:                    # v7x: 64 MiB per TensorCore
        budget, limit_cap = 42 * 1024 * 1024, 54 * 1024 * 1024
    else:                                          # v5e / v6e: 128 MiB
        budget, limit_cap = 100 * 1024 * 1024, 116 * 1024 * 1024

    # User overrides: round to legal (full-dim or (8,128)-aligned) values.
    if block_h is not None:
        TH = H if block_h >= H else max(128, (block_h // 128) * 128)
    else:
        TH = _pick_th(H, 2048)
    if block_b is not None:
        TB = B if block_b >= B else max(8, (block_b // 8) * 8)
    else:
        TB = B if B <= 512 else 512

    def fp(tb, th):
        stream = tb * K + K * th + tb * th         # xh, W, out tiles (in dtype)
        bias = th * 4 if has_bias else 0           # f32 bias tile
        dbuf = 2 * (stream * itemsize + bias)      # double-buffered pipeline
        temps = 2 * tb * th * 4                    # f32 matmul acc + act temp
        return dbuf + temps

    if block_b is None and block_h is None:
        while fp(TB, TH) > budget and TH % 256 == 0 and TH > 128:
            TH //= 2
        while fp(TB, TH) > budget and TB % 16 == 0 and TB > 8:
            TB //= 2
        # Ensure >1 grid tile so v7x's second TensorCore gets work and weight
        # DMA overlaps compute instead of sitting in the prologue.
        if pl.cdiv(B, TB) * pl.cdiv(H, TH) == 1:
            if TH % 256 == 0:
                TH //= 2
            elif TB % 16 == 0:
                TB //= 2

    vmem_limit = int(min(limit_cap, max(32 * 1024 * 1024,
                                        fp(TB, TH) + 12 * 1024 * 1024)))
    return TB, TH, vmem_limit


# --------------------------------------------------------------------------- #
# pallas_call wrapper
# --------------------------------------------------------------------------- #
def _fused_rnn_matmul(xh, w, bias, nonlinearity, block_b=None, block_h=None):
    """out = act(xh @ w + bias); w is K-major [K, H]."""
    B, K = xh.shape
    Kw, H = w.shape
    assert K == Kw
    has_bias = bias is not None

    itemsize = max(jnp.dtype(xh.dtype).itemsize, jnp.dtype(w.dtype).itemsize)
    TB, TH, vmem_limit = _tile_plan(B, K, H, itemsize, has_bias,
                                    block_b, block_h)

    # Hidden tiles on the OUTER axis, batch tiles innermost: the (large) weight
    # tile's block index is constant across the inner axis, so Pallas fetches
    # each weight tile from HBM exactly once.
    grid = (pl.cdiv(H, TH), pl.cdiv(B, TB))

    in_specs = [
        pl.BlockSpec((TB, K), lambda j, i: (i, 0)),   # xh: batch-tiled (inner)
        pl.BlockSpec((K, TH), lambda j, i: (0, j)),   # W : hidden-tiled (outer)
    ]
    args = [xh, w]
    if has_bias:
        in_specs.append(pl.BlockSpec((1, TH), lambda j, i: (0, j)))
        args.append(bias)

    out_spec = pl.BlockSpec((TB, TH), lambda j, i: (i, j))  # lane-dense output

    kernel = functools.partial(_rnn_cell_kernel,
                               nonlinearity=nonlinearity, has_bias=has_bias)

    return pl.pallas_call(
        kernel,
        out_shape=jax.ShapeDtypeStruct((B, H), xh.dtype),
        grid_spec=pltpu.PrefetchScalarGridSpec(
            num_scalar_prefetch=0,
            grid=grid,
            in_specs=in_specs,
            out_specs=out_spec,
        ),
        compiler_params=pltpu.CompilerParams(
            dimension_semantics=("parallel", "parallel"),
            vmem_limit_bytes=vmem_limit,
        ),
    )(*args)


# --------------------------------------------------------------------------- #
# Public API
# --------------------------------------------------------------------------- #
def prepare_rnn_cell_params(weight_ih, weight_hh, bias_ih=None, bias_hh=None):
    """One-time param prep (do NOT repeat per call / per timestep).

    weight_ih: [H, I], weight_hh: [H, H] (PyTorch layout).
    Returns K-major fused weight [(I+H), H], K-major W_ih.T [I, H] for the
    hidden=None fast path, and the fused f32 bias [1, H] (or None).
    """
    H, I = weight_ih.shape
    assert weight_hh.shape == (H, H)
    w_full = jnp.concatenate([weight_ih, weight_hh], axis=1).T   # (I+H, H)
    w_x = jnp.transpose(weight_ih)                               # (I, H)
    bias = None
    if bias_ih is not None or bias_hh is not None:
        b0 = (jnp.zeros((H,), jnp.float32) if bias_ih is None
              else bias_ih.astype(jnp.float32))
        b1 = (jnp.zeros((H,), jnp.float32) if bias_hh is None
              else bias_hh.astype(jnp.float32))
        bias = (b0 + b1).reshape(1, H)                           # f32
    return {'w_full': w_full, 'w_x': w_x, 'bias': bias}


def rnn_cell_forward_prepared(x, hidden, params, nonlinearity='tanh',
                              block_b=None, block_h=None):
    """RNNCell.forward using pre-prepared (K-major, fused) parameters."""
    assert nonlinearity in ('tanh', 'relu')
    if hidden is None:
        # Fast path: skip the zero-hidden matmul and the W_hh HBM stream.
        xh, w = x, params['w_x']
    else:
        xh = jnp.concatenate([x, hidden.astype(x.dtype)], axis=1)
        w = params['w_full']
    return _fused_rnn_matmul(xh, w, params['bias'], nonlinearity,
                             block_b, block_h)


def rnn_cell_forward(x, hidden, weight_ih, weight_hh, bias_ih=None,
                     bias_hh=None, nonlinearity='tanh',
                     block_b=None, block_h=None):
    """Convenience wrapper taking raw PyTorch-layout parameters.

    For sequence workloads prefer `prepare_rnn_cell_params` once +
    `rnn_cell_forward_prepared` per step, so the weight fuse/transpose is not
    redone per call.
    """
    params = prepare_rnn_cell_params(weight_ih, weight_hh, bias_ih, bias_hh)
    return rnn_cell_forward_prepared(x, hidden, params, nonlinearity,
                                     block_b, block_h)


def init_rnn_cell_params(key, input_size, hidden_size, bias=True,
                         dtype=jnp.float32):
    """Deterministic re-implementation of RNNCell.reset_parameters()."""
    stdv = 1.0 / math.sqrt(hidden_size)
    k1, k2, k3, k4 = jax.random.split(key, 4)
    weight_ih = jax.random.uniform(k1, (hidden_size, input_size),
                                   minval=-stdv, maxval=stdv, dtype=dtype)
    weight_hh = jax.random.uniform(k2, (hidden_size, hidden_size),
                                   minval=-stdv, maxval=stdv, dtype=dtype)
    if bias:
        bias_ih = jax.random.uniform(k3, (hidden_size,), minval=-stdv,
                                     maxval=stdv, dtype=dtype)
        bias_hh = jax.random.uniform(k4, (hidden_size,), minval=-stdv,
                                     maxval=stdv, dtype=dtype)
    else:
        bias_ih = None
        bias_hh = None
    return weight_ih, weight_hh, bias_ih, bias_hh


# --------------------------------------------------------------------------- #
# Self-test
# --------------------------------------------------------------------------- #
if __name__ == "__main__":
    key = jax.random.PRNGKey(0)
    dtype = jnp.float32

    # --- small demo shapes consistent with the module -----------------------
    batch, input_size, hidden_size = 2, 16, 32
    kp, kx, kh, kp2, kx2, kh2 = jax.random.split(key, 6)
    weight_ih, weight_hh, bias_ih, bias_hh = init_rnn_cell_params(
        kp, input_size, hidden_size, bias=True, dtype=dtype)
    x = jax.random.normal(kx, (batch, input_size), dtype=dtype)
    h0 = jax.random.normal(kh, (batch, hidden_size), dtype=dtype)

    # Prepared-params path (tanh, explicit hidden)
    prepared = prepare_rnn_cell_params(weight_ih, weight_hh, bias_ih, bias_hh)
    h_next = jax.block_until_ready(
        rnn_cell_forward_prepared(x, h0, prepared, 'tanh'))
    ref = jnp.tanh(x @ weight_ih.T + h0 @ weight_hh.T + bias_ih + bias_hh)
    assert h_next.shape == (batch, hidden_size)
    assert jnp.allclose(h_next, ref, atol=1e-5, rtol=1e-4)

    # hidden=None fast path (skips W_hh stream entirely)
    h_next0 = jax.block_until_ready(
        rnn_cell_forward_prepared(x, None, prepared, 'tanh'))
    ref0 = jnp.tanh(x @ weight_ih.T + bias_ih + bias_hh)
    assert jnp.allclose(h_next0, ref0, atol=1e-5, rtol=1e-4)

    # relu, no bias, via the raw-parameter convenience wrapper
    h_relu = jax.block_until_ready(
        rnn_cell_forward(x, h0, weight_ih, weight_hh, None, None, 'relu'))
    ref_relu = jnp.maximum(x @ weight_ih.T + h0 @ weight_hh.T, 0.0)
    assert jnp.allclose(h_relu, ref_relu, atol=1e-5, rtol=1e-4)

    # --- multi-tile grid path (forced small tiles -> (2, 2) grid) -----------
    B2, I2, H2 = 16, 64, 256
    w_ih2, w_hh2, b_ih2, b_hh2 = init_rnn_cell_params(kp2, I2, H2, True, dtype)
    x2 = jax.random.normal(kx2, (B2, I2), dtype=dtype)
    h02 = jax.random.normal(kh2, (B2, H2), dtype=dtype)
    h2 = jax.block_until_ready(
        rnn_cell_forward(x2, h02, w_ih2, w_hh2, b_ih2, b_hh2, 'tanh',
                         block_b=8, block_h=128))   # grid = (2, 2)
    ref2 = jnp.tanh(x2 @ w_ih2.T + h02 @ w_hh2.T + b_ih2 + b_hh2)
    assert jnp.allclose(h2, ref2, atol=1e-5, rtol=1e-4)

    # Auto-tiled on the same shapes (exercises the >=2-tile split heuristic)
    h2a = jax.block_until_ready(
        rnn_cell_forward(x2, h02, w_ih2, w_hh2, b_ih2, b_hh2, 'tanh'))
    assert jnp.allclose(h2a, ref2, atol=1e-5, rtol=1e-4)

    # bf16 activation/weight path (f32 accumulation + f32 bias fold)
    hbf = jax.block_until_ready(
        rnn_cell_forward(x2.astype(jnp.bfloat16), h02.astype(jnp.bfloat16),
                         w_ih2.astype(jnp.bfloat16), w_hh2.astype(jnp.bfloat16),
                         b_ih2, b_hh2, 'tanh'))
    assert jnp.allclose(hbf.astype(jnp.float32), ref2, atol=3e-2, rtol=3e-2)

    print("KERNEL_OK")
</pallas_src>

<mosaic_0001>
module attributes {stable_mosaic.version = 11 : i64} {
  func.func @_rnn_cell_kernel(%arg0: i32, %arg1: i32, %arg2: memref<2x48xf32, #tpu.memory_space<vmem>>, %arg3: memref<48x32xf32, #tpu.memory_space<vmem>>, %arg4: memref<1x32xf32, #tpu.memory_space<vmem>>, %arg5: memref<2x32xf32, #tpu.memory_space<vmem>>) attributes {dimension_semantics = [#tpu.dimension_semantics<parallel>, #tpu.dimension_semantics<parallel>], iteration_bounds = array<i64: 1, 1>, scalar_prefetch = 0 : i64, scratch_operands = 0 : i64, tpu.core_type = #tpu.core_type<tc>, window_params = [{transform_indices = @transform_0, window_bounds = array<i64: 2, 48>}, {transform_indices = @transform_1, window_bounds = array<i64: 48, 32>}, {transform_indices = @transform_2, window_bounds = array<i64: 1, 32>}, {transform_indices = @transform_3, window_bounds = array<i64: 2, 32>}]} {
    %c0 = arith.constant 0 : index
    %c0_0 = arith.constant 0 : index
    %0 = vector.load %arg2[%c0, %c0_0] : memref<2x48xf32, #tpu.memory_space<vmem>>, vector<2x48xf32>
    %c0_1 = arith.constant 0 : index
    %c0_2 = arith.constant 0 : index
    %1 = vector.load %arg3[%c0_1, %c0_2] : memref<48x32xf32, #tpu.memory_space<vmem>>, vector<48x32xf32>
    %cst = arith.constant dense<0.000000e+00> : vector<2x32xf32>
    %2 = tpu.matmul %0, %1, %cst {dimension_numbers = #tpu.dot_dimension_numbers<[1], [0], [0], [1], [0, 0, 1, 1], [], []>} : vector<2x48xf32>, vector<48x32xf32>, vector<2x32xf32> -> vector<2x32xf32>
    %c0_3 = arith.constant 0 : index
    %c0_4 = arith.constant 0 : index
    %3 = vector.load %arg4[%c0_3, %c0_4] : memref<1x32xf32, #tpu.memory_space<vmem>>, vector<1x32xf32>
    %4 = vector.broadcast %3 : vector<1x32xf32> to vector<2x32xf32>
    %5 = arith.addf %2, %4 : vector<2x32xf32>
    %6 = math.tanh %5 : vector<2x32xf32>
    %c0_5 = arith.constant 0 : index
    %c0_6 = arith.constant 0 : index
    %7 = vector.load %arg5[%c0_5, %c0_6] : memref<2x32xf32, #tpu.memory_space<vmem>>, vector<2x32xf32>
    tpu.vector_store %arg5[%c0_5, %c0_6], %6 {strides = array<i32>} : memref<2x32xf32, #tpu.memory_space<vmem>>, vector<2x32xf32>,
    return
  }
  func.func @transform_0(%arg0: i32, %arg1: i32) -> (i32, i32) {
    %c0_i32 = arith.constant 0 : i32
    %c0_i32_0 = arith.constant 0 : i32
    return %arg1, %c0_i32 : i32, i32
  }
  func.func @transform_1(%arg0: i32, %arg1: i32) -> (i32, i32) {
    %c0_i32 = arith.constant 0 : i32
    %c0_i32_0 = arith.constant 0 : i32
    return %c0_i32, %arg0 : i32, i32
  }
  func.func @transform_2(%arg0: i32, %arg1: i32) -> (i32, i32) {
    %c0_i32 = arith.constant 0 : i32
    %c0_i32_0 = arith.constant 0 : i32
    return %c0_i32, %arg0 : i32, i32
  }
  func.func @transform_3(%arg0: i32, %arg1: i32) -> (i32, i32) {
    %c0_i32 = arith.constant 0 : i32
    return %arg1, %arg0 : i32, i32
  }
}

</mosaic_0001>

<llo_original>
// kernel: tpu_custom_call.1
$region0: #{tpu_custom_call.1}
  #allocation0 [shape = 'u32[]', space=smem, size = 0x4, offset = 0x4, fixed_abs, tag = 'smem constant byte address 0x4 - core index']
  #allocation1 [shape = 'u32[144,128]{1,0:T(1,128)}', space=vmem, size = 0x12000, scoped, tag = 'internal scratch']
  %s0 = inlined_call_operand.vmem [shape: f32[2,48], index: 0, kind: input, shape index: {}]
  %s1 = inlined_call_operand.vmem [shape: f32[48,32], index: 1, kind: input, shape index: {}]
  %s2 = inlined_call_operand.vmem [shape: f32[1,32], index: 2, kind: input, shape index: {}]
  %s3 = inlined_call_operand.hbm [shape: f32[2,32], index: 3, kind: output, shape index: {}]
  %s4 = sld [smem:[#allocation0]]
  $region22: #{tpu_custom_call.1} parent=0
    _
  %s6 = ssub.s32 1, %s4
  %s7 = scalar_select 0, %s6, %s4
  $region1: #{tpu_custom_call.1} parent=0
    #allocation2 [shape = 'u8[1024]{0}', space=vmem, size = 0x400, scoped, tag = 'output window, operand 0, single buffered']
    #allocation3 [shape = 's32[1]{0}', space=sflag, size = 0x4, scoped, tag = 'scoped memory for tpu_custom_call.1']
    %8 = vsyncpa [#allocation3], 0
    // Predicated region
    $region2: #{tpu_custom_call.1} parent=1 // pred_check
      _
    $region3: #{tpu_custom_call.1} parent=1 // pred_check_branch
      %10 = sbr.rel (0) target = $region5
    $region4: #{tpu_custom_call.1} parent=1 // pred_region
      _
    $region5: #{tpu_custom_call.1} parent=1 // pred_fallthru
      _
    // Predicated region
    $region6: #{tpu_custom_call.1} parent=1 // pred_check
      _
    $region7: #{tpu_custom_call.1} parent=1 // pred_check_branch
      %12 = sbr.rel (0) target = $region9
    $region8: #{tpu_custom_call.1} parent=1 // pred_region
      _
    $region9: #{tpu_custom_call.1} parent=1 // pred_fallthru
      _
    // Predicated region
    $region10: #{tpu_custom_call.1} parent=1 // pred_check
      _
    $region11: #{tpu_custom_call.1} parent=1 // pred_check_branch
      %14 = sbr.rel (0) target = $region13
    $region12: #{tpu_custom_call.1} parent=1 // pred_region
      _
    $region13: #{tpu_custom_call.1} parent=1 // pred_fallthru
      _
    %v15 = vld [vmem:[%s0] sm:$0x3]
    %v16 = vld [vmem:[%s1] sm:$0xff]
    %v17 = vld [vmem:[%s1 + $0x8] sm:$0xff]
    %v18 = vld [vmem:[%s1 + $0x10] sm:$0xff]
    %v19 = vld [vmem:[%s1 + $0x18] sm:$0xff]
    %v20 = vld [vmem:[%s1 + $0x20] sm:$0xff]
    %v21 = vld [vmem:[%s1 + $0x28] sm:$0xff]
    %v22 = vld [vmem:[%s2] sm:$0x1]
    %v24 = vlaneseq
    %v25 = vshrl.u32 %v24, 7
    %v26 = vsub.s32 0, %v25
    %v27 = vrot.slane %v22, %v26
    %vm29 = vcmask 392192
    %v31 = vsel %vm29, %v15, 0
    %33 = vmatprep.subr.mxu0 0.0
    %34 = vmatpush1.msra.mxu0 %v16
    %35 = vmatprep.subr.mxu0 0.0
    %36 = vmatpush1.msra.mxu0 %v17
    %37 = vmatprep.subr.mxu0 0.0
    %38 = vmatpush1.msra.mxu0 %v18
    %39 = vmatprep.subr.mxu0 0.0
    %40 = vmatpush1.msra.mxu0 %v19
    %41 = vmatprep.subr.mxu0 0.0
    %42 = vmatpush1.msra.mxu0 %v20
    %43 = vmatprep.subr.mxu0 0.0
    %44 = vmatpush1.msra.mxu0 %v21
    %45 = vmatprep.subr.mxu0 0.0
    %46 = vmatpush1.msra.mxu0 0.0
    %47 = vmatprep.subr.mxu0 0.0
    %48 = vmatpush1.msra.mxu0 0.0
    %49 = vmatprep.subr.mxu0 0.0
    %50 = vmatpush1.msra.mxu0 0.0
    %51 = vmatprep.subr.mxu0 0.0
    %52 = vmatpush1.msra.mxu0 0.0
    %53 = vmatprep.subr.mxu0 0.0
    %54 = vmatpush1.msra.mxu0 0.0
    %55 = vmatprep.subr.mxu0 0.0
    %56 = vmatpush1.msra.mxu0 0.0
    %57 = vmatprep.subr.mxu0 0.0
    %58 = vmatpush1.msra.mxu0 0.0
    %59 = vmatprep.subr.mxu0 0.0
    %60 = vmatpush1.msra.mxu0 0.0
    %61 = vmatprep.subr.mxu0 0.0
    %62 = vmatpush1.msra.mxu0 0.0
    %63 = vmatprep.subr.mxu0 0.0
    %64 = vmatpush1.msra.mxu0 0.0
    %65 = vmatprep.subr.mxu0 0.0
    %66 = vmatpush1.msra.mxu0 0.0
    %67 = vmatprep.subr.mxu0 0.0
    %68 = vmatpush1.msra.mxu0 0.0
    %69 = vmatprep.subr.mxu0 0.0
    %70 = vmatpush1.msra.mxu0 0.0
    %71 = vmatprep.subr.mxu0 0.0
    %72 = vmatpush1.msra.mxu0 0.0
    %73 = vmatprep.subr.mxu0 0.0
    %74 = vmatpush1.msra.mxu0 0.0
    %75 = vmatprep.subr.mxu0 0.0
    %76 = vmatpush1.msra.mxu0 0.0
    %77 = vmatprep.subr.mxu0 0.0
    %78 = vmatpush1.msra.mxu0 0.0
    %79 = vmatprep.subr.mxu0 0.0
    %80 = vmatpush1.msra.mxu0 0.0
    %81 = vmatprep.subr.mxu0 0.0
    %82 = vmatpush1.msra.mxu0 0.0
    %83 = vmatprep.subr.mxu0 0.0
    %84 = vmatpush1.msra.mxu0 0.0
    %85 = vmatprep.subr.mxu0 0.0
    %86 = vmatpush1.msra.mxu0 0.0
    %87 = vmatprep.subr.mxu0 0.0
    %88 = vmatpush1.msra.mxu0 0.0
    %89 = vmatprep.subr.mxu0 0.0
    %90 = vmatpush1.msra.mxu0 0.0
    %91 = vmatprep.subr.mxu0 0.0
    %92 = vmatpush1.msra.mxu0 0.0
    %93 = vmatprep.subr.mxu0 0.0
    %94 = vmatpush1.msra.mxu0 0.0
    %95 = vmatprep.subr.mxu0 0.0
    %96 = vmatpush1.msra.mxu0 0.0
    %97 = vmatprep.mubr.f32.mxu0 0.0
    %98 = vmatmul.mubr.f32.gmra.mrb[0].mxu0 %v31
    %v99 = vpop.f32.mrb[0].mxu0
    %v100 = vadd.f32 %v27, %v99
    %v101 = vpop.f32.mrb[0].mxu0
    %102 = vdwg.mxu0
    %v103 = vtanh.pop %v100
    %vm104 = vcmask 254976
    %105 = vst.msk [vmem:[#allocation2] sm:$0x3] %vm104, %v103
    // Predicated region
    $region14: #{tpu_custom_call.1} parent=1 // pred_check
      _
    $region15: #{tpu_custom_call.1} parent=1 // pred_check_branch
      %107 = sbr.rel (0) target = $region17
    $region16: #{tpu_custom_call.1} parent=1 // pred_region
      %s109 = ssub.s32 32, 32
      %110 = vsyncadd [#allocation3], %s109
      %s112 = sshll.u32 [#allocation2], 4
      %s113 = int_to_ptr.vmem [resolvable:$true] %s112
      %115 = dma.vmem_to_hbm [thread:$0]  %s113, 32, %s3, [#allocation3]
    $region17: #{tpu_custom_call.1} parent=1 // pred_fallthru
      _
    // Predicated region
    $region18: #{tpu_custom_call.1} parent=1 // pred_check
      _
    $region19: #{tpu_custom_call.1} parent=1 // pred_check_branch
      %117 = sbr.rel (0) target = $region21
    $region20: #{tpu_custom_call.1} parent=1 // pred_region
      %118 = dma.done [#allocation3], 32
    $region21: #{tpu_custom_call.1} parent=1 // pred_fallthru
      _
    %119 = vsyncpa [#allocation3], 1

</llo_original>
